<compile_context>
chip_gen: v5e
topology: v5e:2x2
jax: 0.10.0
libtpu: 0.0.40
codegen_flags: <defaults>
</compile_context>

<pallas_src>
import functools
import math

import jax
import jax.numpy as jnp
from jax.experimental import pallas as pl
from jax.experimental.pallas import tpu as pltpu


def _layernorm_kernel(x_ref, g_ref, b_ref, o_ref, *, eps):
    # x_ref: (TILE_ROWS, H); g_ref / b_ref: (1, H), resident across grid steps.
    x = x_ref[...].astype(jnp.float32)
    mean = jnp.mean(x, axis=-1, keepdims=True)          # XLU reduction
    d = x - mean
    var = jnp.mean(d * d, axis=-1, keepdims=True)       # biased, matches torch .mean()
    inv_std = jax.lax.rsqrt(var + eps)                   # EUP slot (free vs VALU)
    gamma = g_ref[...].astype(jnp.float32)               # hoisted: once per tile
    beta = b_ref[...].astype(jnp.float32)
    o_ref[...] = (gamma * (d * inv_std) + beta).astype(o_ref.dtype)


def _row_alignment(dtype) -> int:
    # Sublane packing: f32 -> 8 rows per vreg tile, bf16 -> 16, int8/fp8 -> 32.
    itemsize = jnp.dtype(dtype).itemsize
    return 8 * max(1, 4 // max(itemsize, 1))


def _pick_tile_rows(rows, hidden, dtype, vmem_budget_bytes):
    """Largest sensible row tile that fits the VMEM budget (capped at 1024)."""
    align = _row_alignment(dtype)
    itemsize = jnp.dtype(dtype).itemsize
    # Double-buffered input + output tiles, plus ~2x headroom for the f32
    # working copy / live vregs inside the kernel body.
    bytes_per_row = hidden * itemsize * 2 * 2 * 2
    max_rows = max(align, vmem_budget_bytes // max(bytes_per_row, 1))
    tile = min(1024, max_rows)
    tile = max(align, (tile // align) * align)
    if rows <= tile:
        # Whole problem fits in one tile: just round rows up to the alignment.
        tile = ((rows + align - 1) // align) * align
    return tile


def layer_normalization(x, gamma, beta, *, eps=1e-5, tile_rows=None):
    """LayerNorm over the trailing dims given by gamma.shape (torch semantics).

    x:     (..., *parameters_shape)
    gamma: parameters_shape
    beta:  parameters_shape
    """
    assert gamma.shape == beta.shape
    norm_dims = len(gamma.shape)
    assert norm_dims >= 1 and x.shape[-norm_dims:] == gamma.shape

    hidden = math.prod(gamma.shape)
    lead_shape = x.shape[:-norm_dims]
    rows = math.prod(lead_shape) if lead_shape else 1

    x2d = x.reshape(rows, hidden)
    g2d = gamma.reshape(1, hidden)
    b2d = beta.reshape(1, hidden)

    if tile_rows is None:
        tile_rows = _pick_tile_rows(rows, hidden, x.dtype,
                                    vmem_budget_bytes=40 << 20)

    # cdiv + pad instead of a divisibility assert: padded rows are normalized
    # independently (finite, since var + eps > 0) and sliced away afterwards.
    num_tiles = pl.cdiv(rows, tile_rows)
    padded_rows = num_tiles * tile_rows
    if padded_rows != rows:
        x2d = jnp.pad(x2d, ((0, padded_rows - rows), (0, 0)))

    out2d = pl.pallas_call(
        functools.partial(_layernorm_kernel, eps=eps),
        out_shape=jax.ShapeDtypeStruct((padded_rows, hidden), x.dtype),
        grid_spec=pl.GridSpec(
            grid=(num_tiles,),
            in_specs=[
                pl.BlockSpec((tile_rows, hidden), lambda i: (i, 0)),
                pl.BlockSpec((1, hidden), lambda i: (0, 0)),
                pl.BlockSpec((1, hidden), lambda i: (0, 0)),
            ],
            out_specs=pl.BlockSpec((tile_rows, hidden), lambda i: (i, 0)),
        ),
        compiler_params=pltpu.CompilerParams(
            dimension_semantics=("parallel",),   # lets v7x shard rows across 2 TCs
            vmem_limit_bytes=48 << 20,           # headroom on v7x's 64 MiB VMEM
        ),
    )(x2d, g2d, b2d)

    if padded_rows != rows:
        out2d = out2d[:rows]
    return out2d.reshape(x.shape)


def _reference(x, gamma, beta, eps):
    norm_dims = len(gamma.shape)
    axes = tuple(range(x.ndim - norm_dims, x.ndim))
    mean = jnp.mean(x, axis=axes, keepdims=True)
    var = jnp.mean((x - mean) ** 2, axis=axes, keepdims=True)
    return gamma * ((x - mean) / jnp.sqrt(var + eps)) + beta


if __name__ == "__main__":
    key = jax.random.PRNGKey(0)

    # Module __init__: parameters_shape = (hidden,), gamma = ones, beta = zeros.
    batch, seq, hidden = 2, 8, 32
    k0, k1, k2 = jax.random.split(key, 3)
    x = jax.random.normal(k0, (batch, seq, hidden), dtype=jnp.float32)
    gamma = jnp.ones((hidden,), dtype=jnp.float32)
    beta = jnp.zeros((hidden,), dtype=jnp.float32)

    out = layer_normalization(x, gamma, beta, eps=1e-5)
    out = jax.block_until_ready(out)
    ref = _reference(x, gamma, beta, 1e-5)
    assert out.shape == x.shape
    assert jnp.max(jnp.abs(out - ref)) < 1e-5

    # Second check: row count not divisible by the chosen tile (exercises the
    # cdiv + pad tail path) and non-trivial gamma/beta.
    x2 = jax.random.normal(k1, (3, 5, hidden), dtype=jnp.float32)
    gamma2 = 1.0 + 0.1 * jax.random.normal(k2, (hidden,), dtype=jnp.float32)
    beta2 = 0.05 * jnp.arange(hidden, dtype=jnp.float32)
    out2 = jax.block_until_ready(layer_normalization(x2, gamma2, beta2, eps=1e-5))
    ref2 = _reference(x2, gamma2, beta2, 1e-5)
    assert out2.shape == x2.shape
    assert jnp.max(jnp.abs(out2 - ref2)) < 1e-4

    print("KERNEL_OK")
</pallas_src>

<mosaic_0001>
module attributes {stable_mosaic.version = 11 : i64} {
  func.func @_layernorm_kernel(%arg0: i32, %arg1: memref<16x32xf32, #tpu.memory_space<vmem>>, %arg2: memref<1x32xf32, #tpu.memory_space<vmem>>, %arg3: memref<1x32xf32, #tpu.memory_space<vmem>>, %arg4: memref<16x32xf32, #tpu.memory_space<vmem>>) attributes {dimension_semantics = [#tpu.dimension_semantics<parallel>], iteration_bounds = array<i64: 1>, scalar_prefetch = 0 : i64, scratch_operands = 0 : i64, tpu.core_type = #tpu.core_type<tc>, window_params = [{transform_indices = @transform_0, window_bounds = array<i64: 16, 32>}, {pipeline_mode = #tpu.pipeline_mode<synchronous>, transform_indices = @transform_1, window_bounds = array<i64: 1, 32>}, {pipeline_mode = #tpu.pipeline_mode<synchronous>, transform_indices = @transform_2, window_bounds = array<i64: 1, 32>}, {transform_indices = @transform_3, window_bounds = array<i64: 16, 32>}]} {
    %c0 = arith.constant 0 : index
    %c0_0 = arith.constant 0 : index
    %0 = vector.load %arg1[%c0, %c0_0] : memref<16x32xf32, #tpu.memory_space<vmem>>, vector<16x32xf32>
    %cst = arith.constant dense<0.000000e+00> : vector<16xf32>
    %1 = vector.multi_reduction <add>, %0, %cst [1] : vector<16x32xf32> to vector<16xf32>
    %2 = vector.shape_cast %1 : vector<16xf32> to vector<16x1xf32>
    %cst_1 = arith.constant 3.200000e+01 : f32
    %3 = vector.broadcast %cst_1 : f32 to vector<16x1xf32>
    %4 = arith.divf %2, %3 : vector<16x1xf32>
    %5 = vector.broadcast %4 : vector<16x1xf32> to vector<16x32xf32>
    %6 = arith.subf %0, %5 : vector<16x32xf32>
    %7 = arith.mulf %6, %6 : vector<16x32xf32>
    %cst_2 = arith.constant dense<0.000000e+00> : vector<16xf32>
    %8 = vector.multi_reduction <add>, %7, %cst_2 [1] : vector<16x32xf32> to vector<16xf32>
    %9 = vector.shape_cast %8 : vector<16xf32> to vector<16x1xf32>
    %cst_3 = arith.constant 3.200000e+01 : f32
    %10 = vector.broadcast %cst_3 : f32 to vector<16x1xf32>
    %11 = arith.divf %9, %10 : vector<16x1xf32>
    %cst_4 = arith.constant 9.99999974E-6 : f32
    %12 = vector.broadcast %cst_4 : f32 to vector<16x1xf32>
    %13 = arith.addf %11, %12 : vector<16x1xf32>
    %14 = math.rsqrt %13 : vector<16x1xf32>
    %c0_5 = arith.constant 0 : index
    %c0_6 = arith.constant 0 : index
    %15 = vector.load %arg2[%c0_5, %c0_6] : memref<1x32xf32, #tpu.memory_space<vmem>>, vector<1x32xf32>
    %c0_7 = arith.constant 0 : index
    %c0_8 = arith.constant 0 : index
    %16 = vector.load %arg3[%c0_7, %c0_8] : memref<1x32xf32, #tpu.memory_space<vmem>>, vector<1x32xf32>
    %17 = vector.broadcast %14 : vector<16x1xf32> to vector<16x32xf32>
    %18 = arith.mulf %6, %17 : vector<16x32xf32>
    %19 = vector.broadcast %15 : vector<1x32xf32> to vector<16x32xf32>
    %20 = arith.mulf %19, %18 : vector<16x32xf32>
    %21 = vector.broadcast %16 : vector<1x32xf32> to vector<16x32xf32>
    %22 = arith.addf %20, %21 : vector<16x32xf32>
    %c0_9 = arith.constant 0 : index
    %c0_10 = arith.constant 0 : index
    %23 = vector.load %arg4[%c0_9, %c0_10] : memref<16x32xf32, #tpu.memory_space<vmem>>, vector<16x32xf32>
    tpu.vector_store %arg4[%c0_9, %c0_10], %22 {strides = array<i32>} : memref<16x32xf32, #tpu.memory_space<vmem>>, vector<16x32xf32>,
    return
  }
  func.func @transform_0(%arg0: i32) -> (i32, i32) {
    %c0_i32 = arith.constant 0 : i32
    %c0_i32_0 = arith.constant 0 : i32
    return %arg0, %c0_i32 : i32, i32
  }
  func.func @transform_1(%arg0: i32) -> (i32, i32) {
    %c0_i32 = arith.constant 0 : i32
    %c0_i32_0 = arith.constant 0 : i32
    %c0_i32_1 = arith.constant 0 : i32
    return %c0_i32, %c0_i32_0 : i32, i32
  }
  func.func @transform_2(%arg0: i32) -> (i32, i32) {
    %c0_i32 = arith.constant 0 : i32
    %c0_i32_0 = arith.constant 0 : i32
    %c0_i32_1 = arith.constant 0 : i32
    return %c0_i32, %c0_i32_0 : i32, i32
  }
  func.func @transform_3(%arg0: i32) -> (i32, i32) {
    %c0_i32 = arith.constant 0 : i32
    %c0_i32_0 = arith.constant 0 : i32
    return %arg0, %c0_i32 : i32, i32
  }
}

</mosaic_0001>

<llo_original>
// kernel: tpu_custom_call.1
$region0: #{tpu_custom_call.1}
  #allocation0 [shape = 'u32[]', space=smem, size = 0x4, offset = 0x4, fixed_abs, tag = 'smem constant byte address 0x4 - core index']
  #allocation1 [shape = 'u32[72,128]{1,0:T(1,128)}', space=vmem, size = 0x9000, scoped, tag = 'internal scratch']
  %s0 = inlined_call_operand.hbm [shape: f32[16,32], index: 0, kind: input, shape index: {}]
  %s1 = inlined_call_operand.hbm [shape: f32[1,32], index: 1, kind: input, shape index: {}]
  %s2 = inlined_call_operand.vmem [shape: f32[1,32], index: 2, kind: input, shape index: {}]
  %s3 = inlined_call_operand.hbm [shape: f32[16,32], index: 3, kind: output, shape index: {}]
  %s4 = sld [smem:[#allocation0]]
  $region30: #{tpu_custom_call.1} parent=0
    _
  %s6 = ssub.s32 1, %s4
  %s7 = scalar_select 0, %s6, %s4
  $region1: #{tpu_custom_call.1} parent=0
    #allocation2 [shape = 'u8[8192]{0}', space=vmem, size = 0x2000, scoped, tag = 'input window, operand 0, single buffered']
    #allocation3 [shape = 's32[1]{0}', space=sflag, size = 0x4, scoped, tag = 'scoped memory for tpu_custom_call.1']
    #allocation4 [shape = 's32[1]{0}', space=sflag, size = 0x4, scoped, tag = 'scoped memory for tpu_custom_call.1']
    #allocation5 [shape = 'u8[512]{0}', space=vmem, size = 0x400, scoped, tag = 'input window, operand 1, single buffered']
    #allocation6 [shape = 's32[1]{0}', space=sflag, size = 0x4, scoped, tag = 'scoped memory for tpu_custom_call.1']
    #allocation7 [shape = 'u8[8192]{0}', space=vmem, size = 0x2000, scoped, tag = 'output window, operand 0, single buffered']
    %8 = vsyncpa [#allocation3], 0
    %9 = vsyncpa [#allocation6], 0
    %10 = vsyncpa [#allocation4], 0
    // Predicated region
    $region2: #{tpu_custom_call.1} parent=1 // pred_check
      _
    $region3: #{tpu_custom_call.1} parent=1 // pred_check_branch
      %12 = sbr.rel (0) target = $region5
    $region4: #{tpu_custom_call.1} parent=1 // pred_region
      %14 = vsyncadd [#allocation3], 0
      %s15 = sshll.u32 %s0, 4
      %s16 = int_to_ptr.hbm [resolvable:$true] %s15
      %s17 = sshll.u32 [#allocation2], 4
      %s18 = int_to_ptr.vmem [resolvable:$true] %s17
      %23 = dma.hbm_to_vmem [thread:$0]  %s16, 256, %s18, [#allocation3], 128, 128, 8
    $region5: #{tpu_custom_call.1} parent=1 // pred_fallthru
      _
    // Predicated region
    $region6: #{tpu_custom_call.1} parent=1 // pred_check
      _
    $region7: #{tpu_custom_call.1} parent=1 // pred_check_branch
      %25 = sbr.rel (0) target = $region9
    $region8: #{tpu_custom_call.1} parent=1 // pred_region
      %27 = vsyncadd [#allocation6], 0
      %s29 = sshll.u32 %s1, 4
      %s30 = int_to_ptr.hbm [resolvable:$true] %s29
      %s31 = sshll.u32 [#allocation5], 4
      %s32 = int_to_ptr.vmem [resolvable:$true] %s31
      %34 = dma.hbm_to_vmem [thread:$0]  %s30, 16, %s32, [#allocation6]
    $region9: #{tpu_custom_call.1} parent=1 // pred_fallthru
      _
    // Predicated region
    $region10: #{tpu_custom_call.1} parent=1 // pred_check
      _
    $region11: #{tpu_custom_call.1} parent=1 // pred_check_branch
      %36 = sbr.rel (0) target = $region13
    $region12: #{tpu_custom_call.1} parent=1 // pred_region
      _
    $region13: #{tpu_custom_call.1} parent=1 // pred_fallthru
      _
    // Predicated region
    $region14: #{tpu_custom_call.1} parent=1 // pred_check
      _
    $region15: #{tpu_custom_call.1} parent=1 // pred_check_branch
      %38 = sbr.rel (0) target = $region17
    $region16: #{tpu_custom_call.1} parent=1 // pred_region
      %40 = dma.done [#allocation3], 256
    $region17: #{tpu_custom_call.1} parent=1 // pred_fallthru
      _
    // Predicated region
    $region18: #{tpu_custom_call.1} parent=1 // pred_check
      _
    $region19: #{tpu_custom_call.1} parent=1 // pred_check_branch
      %42 = sbr.rel (0) target = $region21
    $region20: #{tpu_custom_call.1} parent=1 // pred_region
      %44 = dma.done [#allocation6], 16
    $region21: #{tpu_custom_call.1} parent=1 // pred_fallthru
      _
    %v45 = vld [vmem:[#allocation2] sm:$0xff]
    %v46 = vld [vmem:[#allocation2 + $0x8] sm:$0xff]
    %vm47 = vcmask 261120
    %v48 = vsel %vm47, %v45, 0.0
    %49 = vadd.xlane.f32.xlu0 %v48
    %v50 = vpop.xlane.xlu0 %49
    %v51 = vsel %vm47, %v46, 0.0
    %52 = vadd.xlane.f32.xlu0 %v51
    %v53 = vpop.xlane.xlu0 %52
    %v54 = vrcp.pop 32.0
    %v55 = vmul.f32 32.0, %v54
    %v56 = vsub.f32 1.0, %v55
    %v57 = vmul.f32 %v54, %v56
    %v58 = vadd.f32 %v54, %v57
    %vm59 = vweird.f32 %v54
    %v60 = vsel %vm59, %v54, %v58
    %v61 = vmul.f32 %v50, %v60
    %v62 = vmul.f32 %v53, %v60
    %v63 = vsub.f32 %v45, %v61
    %v64 = vsub.f32 %v46, %v62
    %v65 = vmul.f32 %v63, %v63
    %v66 = vmul.f32 %v64, %v64
    %v67 = vsel %vm47, %v65, 0.0
    %68 = vadd.xlane.f32.xlu0 %v67
    %v69 = vpop.xlane.xlu0 %68
    %v70 = vsel %vm47, %v66, 0.0
    %71 = vadd.xlane.f32.xlu0 %v70
    %v72 = vpop.xlane.xlu0 %71
    %v73 = vmul.f32 %v69, %v60
    %v74 = vmul.f32 %v72, %v60
    %v75 = vadd.f32 %v73, 1e-05
    %v76 = vadd.f32 %v74, 1e-05
    %v77 = vrsqrt.pop %v75
    %v78 = vmul.f32 %v77, %v75
    %v79 = vmul.f32 %v78, %v77
    %v80 = vmul.f32 0.5, %v79
    %v81 = vsub.f32 1.5, %v80
    %v82 = vmul.f32 %v77, %v81
    %vm83 = vweird.f32 %v75
    %vm84 = vweird.f32 %v77
    %vm85 = vmor %vm83, %vm84
    %v86 = vsel %vm85, %v77, %v82
    %v87 = vrsqrt.pop %v76
    %v88 = vmul.f32 %v87, %v76
    %v89 = vmul.f32 %v88, %v87
    %v90 = vmul.f32 0.5, %v89
    %v91 = vsub.f32 1.5, %v90
    %v92 = vmul.f32 %v87, %v91
    %vm93 = vweird.f32 %v76
    %vm94 = vweird.f32 %v87
    %vm95 = vmor %vm93, %vm94
    %v96 = vsel %vm95, %v87, %v92
    %v97 = vld [vmem:[#allocation5] sm:$0x1]
    %v98 = vld [vmem:[%s2] sm:$0x1]
    %v99 = vmul.f32 %v63, %v86
    %v100 = vmul.f32 %v64, %v96
    %v102 = vperm.slane %v97, 0
    %v104 = vmul.f32 %v102, %v99
    %v105 = vmul.f32 %v102, %v100
    %v107 = vperm.slane %v98, 0
    %v109 = vadd.f32 %v104, %v107
    %v110 = vadd.f32 %v105, %v107
    %111 = vst.msk [vmem:[#allocation7] sm:$0xff] %vm47, %v109
    %112 = vst.msk [vmem:[#allocation7 + $0x8] sm:$0xff] %vm47, %v110
    // Predicated region
    $region22: #{tpu_custom_call.1} parent=1 // pred_check
      _
    $region23: #{tpu_custom_call.1} parent=1 // pred_check_branch
      %114 = sbr.rel (0) target = $region25
    $region24: #{tpu_custom_call.1} parent=1 // pred_region
      %116 = vsyncadd [#allocation4], 0
      %s117 = sshll.u32 [#allocation7], 4
      %s118 = int_to_ptr.vmem [resolvable:$true] %s117
      %s119 = sshll.u32 %s3, 4
      %s120 = int_to_ptr.hbm [resolvable:$true] %s119
      %125 = dma.vmem_to_hbm [thread:$0]  %s118, 256, %s120, [#allocation4], 128, 128, 8
    $region25: #{tpu_custom_call.1} parent=1 // pred_fallthru
      _
    // Predicated region
    $region26: #{tpu_custom_call.1} parent=1 // pred_check
      _
    $region27: #{tpu_custom_call.1} parent=1 // pred_check_branch
      %127 = sbr.rel (0) target = $region29
    $region28: #{tpu_custom_call.1} parent=1 // pred_region
      %129 = dma.done [#allocation4], 256
    $region29: #{tpu_custom_call.1} parent=1 // pred_fallthru
      _
    %130 = vsyncpa [#allocation3], 1
    %131 = vsyncpa [#allocation6], 1
    %132 = vsyncpa [#allocation4], 1

</llo_original>
